<compile_context>
chip_gen: v7x
topology: tpu7x:2x2x1
jax: 0.10.0
libtpu: 0.0.40
codegen_flags: <defaults>
</compile_context>

<pallas_src>
import functools

import jax
import jax.numpy as jnp
from jax import lax
from jax.experimental import pallas as pl
from jax.experimental.pallas import tpu as pltpu

ALPHA = 0.25
GAMMA = 2.0


def _round_up(x, m):
    return (x + m - 1) // m * m


def _cdiv(a, b):
    return -(-a // b)


def _chip_kind():
    try:
        return jax.devices()[0].device_kind.lower()
    except Exception:
        return ""


def _num_tensorcores(kind):
    # v7x has 2 TensorCores per chip (megacore-style sharding via a leading
    # "parallel" grid axis); v5e / v6e have a single TensorCore.
    return 2 if "v7" in kind else 1


def _vmem_budget_and_cap(kind):
    # (working-set budget used to size tiles, max vmem_limit_bytes to request)
    if "v7" in kind:
        return (36 << 20, 48 << 20)    # 64 MiB physical VMEM -> stay well under
    if "v6" in kind:
        return (56 << 20, 96 << 20)    # 128 MiB physical
    if "v5" in kind:
        return (28 << 20, 96 << 20)    # bandwidth-starved; smaller blocks suffice
    return (28 << 20, 48 << 20)        # unknown chip: conservative


def _per_row_vmem_bytes(c, in_itemsize):
    # 2x double-buffered (tile_n, C) logits block in the input dtype
    # + ~5 block-sized f32/int32 temporaries (upcast, shifted, exp, iota, select)
    # + double-buffered (tile_n, 1) int32 targets and (tile_n, 1) f32 output
    #   blocks, each lane-padded to 128 lanes in VMEM.
    return 2 * c * in_itemsize + 5 * c * 4 + 4 * 128 * 4 + 64


def _pick_tile_n(n_rows, c, in_itemsize, budget_bytes, min_blocks=1):
    per_row = _per_row_vmem_bytes(c, in_itemsize)
    budget_rows = max(8, (budget_bytes // per_row) // 8 * 8)
    budget_rows = min(budget_rows, 32768)
    cap_rows = _round_up(_cdiv(n_rows, max(min_blocks, 1)), 8)
    tile = min(budget_rows, cap_rows)
    if tile >= n_rows:
        return n_rows  # single full-extent block (always a legal block shape)
    return max(8, tile)


def _vmem_limit_bytes(tile_n, c, in_itemsize, cap):
    # TODO(synk): for extremely large C (single row-block > VMEM) an online LSE
    # over a class grid axis would be needed; this limit just reports the need.
    need = tile_n * _per_row_vmem_bytes(c, in_itemsize) + (4 << 20)
    return int(min(max(need, 32 << 20), cap))


def _cost_estimate(n_rows, c, itemsize):
    return pl.CostEstimate(
        flops=10 * n_rows * c,
        transcendentals=n_rows * c + 3 * n_rows,
        bytes_accessed=n_rows * c * itemsize + 2 * n_rows * 4 + 8 * 128 * 4,
    )


def _per_row_focal(x, t, *, alpha, gamma, row_start, n_valid):
    """x: (T, C) logits, t: (T, 1) int32 targets -> ((T,1) focal, (T,1) row-valid)."""
    x = x.astype(jnp.float32)                                   # upcast in-register
    m = jnp.max(x, axis=-1, keepdims=True)                      # (T, 1)
    shifted = x - m                                             # (T, C)
    s = jnp.sum(jnp.exp(shifted), axis=-1, keepdims=True)       # (T, 1)

    col = lax.broadcasted_iota(jnp.int32, x.shape, 1)           # (T, C)
    is_t = col == t                                             # (T, C) one-hot mask
    shifted_t = jnp.sum(jnp.where(is_t, shifted, 0.0), axis=-1, keepdims=True)

    log_s = jnp.log(s)                                          # >= 0
    ce = log_s - shifted_t                                      # per-row cross entropy
    pt = jnp.exp(shifted_t - log_s)                             # = exp(-ce), per-row only
    w = jnp.maximum(1.0 - pt, 0.0)                              # clamp: no NaN from rounding

    g = float(gamma)
    if g.is_integer() and 0.0 <= g <= 8.0:
        wg = jnp.ones_like(w)
        for _ in range(int(g)):
            wg = wg * w
    else:
        # TODO(synk): non-integer gamma falls back to jnp.power (exp/log on EUP).
        wg = jnp.power(w, jnp.float32(g))

    focal = jnp.float32(alpha) * wg * ce                        # (T, 1)

    row = row_start + lax.broadcasted_iota(jnp.int32, focal.shape, 0)
    row_ok = row < n_valid
    return focal, row_ok


def _focal_loss_reduce_kernel(logits_ref, targets_ref, out_ref, *,
                              alpha, gamma, n_valid, tile_n, tiles_per_core):
    cc = pl.program_id(0)   # core / batch-half axis ("parallel")
    i = pl.program_id(1)    # reduction axis over row tiles ("arbitrary")

    @pl.when(i == 0)
    def _():
        out_ref[...] = jnp.zeros_like(out_ref)

    # Unclamped logical row start: duplicate / out-of-range tail iterations get
    # row_start >= n_valid and therefore contribute exactly 0.
    row_start = (cc * tiles_per_core + i) * tile_n
    focal, row_ok = _per_row_focal(
        logits_ref[...], targets_ref[...],
        alpha=alpha, gamma=gamma, row_start=row_start, n_valid=n_valid)
    out_ref[...] += jnp.sum(jnp.where(row_ok, focal, 0.0))


def _focal_loss_rows_kernel(logits_ref, targets_ref, out_ref, *,
                            alpha, gamma, n_valid, tile_n):
    row_start = pl.program_id(0) * tile_n
    focal, row_ok = _per_row_focal(
        logits_ref[...], targets_ref[...],
        alpha=alpha, gamma=gamma, row_start=row_start, n_valid=n_valid)
    out_ref[...] = jnp.where(row_ok, focal, 0.0)


def focal_loss(logits, targets, *, alpha=ALPHA, gamma=GAMMA, reduction="mean"):
    """logits: (N, C) float array, targets: (N,) int array of class indices."""
    n, c = logits.shape
    targets2d = targets.astype(jnp.int32).reshape(n, 1)

    kind = _chip_kind()
    num_cores = _num_tensorcores(kind)
    budget, vmem_cap = _vmem_budget_and_cap(kind)
    itemsize = logits.dtype.itemsize

    if reduction in ("mean", "sum"):
        tile_n = _pick_tile_n(n, c, itemsize, budget, min_blocks=num_cores)
        nblocks = _cdiv(n, tile_n)
        tiles_per_core = _cdiv(nblocks, num_cores)
        last_block = nblocks - 1

        def block_idx(cc, i):
            # Clamp so duplicate tail iterations (nblocks % num_cores != 0 or a
            # tiny batch) re-read an in-bounds block; the row mask zeroes them.
            return jnp.minimum(cc * tiles_per_core + i, last_block)

        kernel = functools.partial(
            _focal_loss_reduce_kernel, alpha=float(alpha), gamma=float(gamma),
            n_valid=n, tile_n=tile_n, tiles_per_core=tiles_per_core)

        # NOTE: if a trace ever shows exposed DMA at tile boundaries, the logits
        # BlockSpec could take pipeline_mode=pl.Buffered(3) (VMEM headroom allows).
        partials = pl.pallas_call(
            kernel,
            out_shape=jax.ShapeDtypeStruct((num_cores * 8, 128), jnp.float32),
            grid_spec=pltpu.PrefetchScalarGridSpec(
                num_scalar_prefetch=0,
                grid=(num_cores, tiles_per_core),
                in_specs=[
                    pl.BlockSpec((tile_n, c), lambda cc, i: (block_idx(cc, i), 0)),
                    pl.BlockSpec((tile_n, 1), lambda cc, i: (block_idx(cc, i), 0)),
                ],
                out_specs=pl.BlockSpec((8, 128), lambda cc, i: (cc, 0)),
            ),
            compiler_params=pltpu.CompilerParams(
                dimension_semantics=("parallel", "arbitrary"),
                vmem_limit_bytes=_vmem_limit_bytes(tile_n, c, itemsize, vmem_cap)),
            cost_estimate=_cost_estimate(n, c, itemsize),
        )(logits, targets2d)

        total = jnp.sum(partials.reshape(num_cores, 8, 128)[:, 0, 0])
        if reduction == "sum":
            return total
        return total / jnp.float32(n)  # 'mean'

    # reduction == 'none' (or anything else, mirroring the PyTorch fall-through)
    tile_n = _pick_tile_n(n, c, itemsize, budget, min_blocks=num_cores)
    nblocks = _cdiv(n, tile_n)

    kernel = functools.partial(
        _focal_loss_rows_kernel, alpha=float(alpha), gamma=float(gamma),
        n_valid=n, tile_n=tile_n)

    # TODO(synk): a lane-dense (tile_n//128, 128) output block would replace the
    # masked (tile_n, 1) column stores, but requires an in-kernel relayout of the
    # per-row column; kept as the simple column store (output is a tiny fraction
    # of HBM traffic except for very small C).
    out = pl.pallas_call(
        kernel,
        out_shape=jax.ShapeDtypeStruct((n, 1), jnp.float32),
        grid_spec=pltpu.PrefetchScalarGridSpec(
            num_scalar_prefetch=0,
            grid=(nblocks,),
            in_specs=[
                pl.BlockSpec((tile_n, c), lambda i: (i, 0)),
                pl.BlockSpec((tile_n, 1), lambda i: (i, 0)),
            ],
            out_specs=pl.BlockSpec((tile_n, 1), lambda i: (i, 0)),
        ),
        compiler_params=pltpu.CompilerParams(
            dimension_semantics=("parallel",),
            vmem_limit_bytes=_vmem_limit_bytes(tile_n, c, itemsize, vmem_cap)),
        cost_estimate=_cost_estimate(n, c, itemsize),
    )(logits, targets2d)
    return out[:, 0]


def _reference_focal_per_sample(logits, targets, alpha=ALPHA, gamma=GAMMA):
    logp = jax.nn.log_softmax(logits.astype(jnp.float32), axis=-1)
    ce = -jnp.take_along_axis(logp, targets[:, None].astype(jnp.int32), axis=-1)[:, 0]
    pt = jnp.exp(-ce)
    return alpha * (1.0 - pt) ** gamma * ce


if __name__ == "__main__":
    key = jax.random.PRNGKey(0)
    k_logits, k_targets, k_logits2, k_targets2 = jax.random.split(key, 4)

    # Small case matching the module's typical use (batch of 8, 32 classes).
    N, C = 8, 32
    logits = jax.random.normal(k_logits, (N, C), dtype=jnp.float32)
    targets = jax.random.randint(k_targets, (N,), 0, C, dtype=jnp.int32)
    ref = _reference_focal_per_sample(logits, targets)

    loss_mean = jax.block_until_ready(focal_loss(logits, targets, reduction="mean"))
    assert jnp.allclose(loss_mean, jnp.mean(ref), atol=1e-5, rtol=1e-5), (
        loss_mean, jnp.mean(ref))

    loss_sum = jax.block_until_ready(focal_loss(logits, targets, reduction="sum"))
    assert jnp.allclose(loss_sum, jnp.sum(ref), atol=1e-5, rtol=1e-5), (
        loss_sum, jnp.sum(ref))

    loss_none = jax.block_until_ready(focal_loss(logits, targets, reduction="none"))
    assert loss_none.shape == (N,)
    assert jnp.allclose(loss_none, ref, atol=1e-5, rtol=1e-5), (loss_none, ref)

    # Non-multiple-of-8 batch / odd class count (full-extent block path).
    N2, C2 = 13, 37
    logits2 = jax.random.normal(k_logits2, (N2, C2), dtype=jnp.float32)
    targets2 = jax.random.randint(k_targets2, (N2,), 0, C2, dtype=jnp.int32)
    ref2 = _reference_focal_per_sample(logits2, targets2)

    loss2_mean = jax.block_until_ready(focal_loss(logits2, targets2, reduction="mean"))
    assert jnp.allclose(loss2_mean, jnp.mean(ref2), atol=1e-5, rtol=1e-5), (
        loss2_mean, jnp.mean(ref2))
    loss2_none = jax.block_until_ready(focal_loss(logits2, targets2, reduction="none"))
    assert jnp.allclose(loss2_none, ref2, atol=1e-5, rtol=1e-5), (loss2_none, ref2)

    print("KERNEL_OK")
</pallas_src>

<mosaic_0001>
module attributes {stable_mosaic.version = 11 : i64} {
  func.func @_focal_loss_reduce_kernel(%arg0: i32, %arg1: i32, %arg2: memref<8x32xf32, #tpu.memory_space<vmem>>, %arg3: memref<8x1xi32, #tpu.memory_space<vmem>>, %arg4: memref<8x128xf32, #tpu.memory_space<vmem>>) attributes {dimension_semantics = [#tpu.dimension_semantics<parallel>, #tpu.dimension_semantics<arbitrary>], iteration_bounds = array<i64: 1, 1>, scalar_prefetch = 0 : i64, scratch_operands = 0 : i64, tpu.core_type = #tpu.core_type<tc>, window_params = [{transform_indices = @transform_0, window_bounds = array<i64: 8, 32>}, {transform_indices = @transform_1, window_bounds = array<i64: 8, 1>}, {transform_indices = @transform_2, window_bounds = array<i64: 8, 128>}]} {
    %c0_i32 = arith.constant 0 : i32
    %0 = arith.cmpi eq, %arg1, %c0_i32 : i32
    %1 = arith.extui %0 : i1 to i32
    %c0_i32_0 = arith.constant 0 : i32
    %2 = arith.cmpi ne, %1, %c0_i32_0 : i32
    scf.if %2 {
      %cst_18 = arith.constant 0.000000e+00 : f32
      %51 = vector.broadcast %cst_18 : f32 to vector<8x128xf32>
      %c0_19 = arith.constant 0 : index
      %c0_20 = arith.constant 0 : index
      %52 = vector.load %arg4[%c0_19, %c0_20] : memref<8x128xf32, #tpu.memory_space<vmem>>, vector<8x128xf32>
      tpu.vector_store %arg4[%c0_19, %c0_20], %51 {strides = array<i32>} : memref<8x128xf32, #tpu.memory_space<vmem>>, vector<8x128xf32>,
    } else {
    }
    %c1_i32 = arith.constant 1 : i32
    %3 = arith.muli %arg0, %c1_i32 : i32
    %4 = arith.addi %3, %arg1 : i32
    %c8_i32 = arith.constant 8 : i32
    %5 = arith.muli %4, %c8_i32 : i32
    %c0 = arith.constant 0 : index
    %c0_1 = arith.constant 0 : index
    %6 = vector.load %arg2[%c0, %c0_1] : memref<8x32xf32, #tpu.memory_space<vmem>>, vector<8x32xf32>
    %c0_2 = arith.constant 0 : index
    %c0_3 = arith.constant 0 : index
    %7 = vector.load %arg3[%c0_2, %c0_3] : memref<8x1xi32, #tpu.memory_space<vmem>>, vector<8x1xi32>
    %cst = arith.constant dense<0xFF800000> : vector<8xf32>
    %8 = vector.multi_reduction <maximumf>, %6, %cst [1] : vector<8x32xf32> to vector<8xf32>
    %9 = vector.shape_cast %8 : vector<8xf32> to vector<8x1xf32>
    %10 = vector.broadcast %9 : vector<8x1xf32> to vector<8x32xf32>
    %11 = arith.subf %6, %10 : vector<8x32xf32>
    %12 = math.exp %11 : vector<8x32xf32>
    %cst_4 = arith.constant dense<0.000000e+00> : vector<8xf32>
    %13 = vector.multi_reduction <add>, %12, %cst_4 [1] : vector<8x32xf32> to vector<8xf32>
    %14 = vector.shape_cast %13 : vector<8xf32> to vector<8x1xf32>
    %15 = tpu.iota {dimensions = array<i32: 1>} : vector<8x32xi32>
    %16 = vector.broadcast %7 : vector<8x1xi32> to vector<8x32xi32>
    %17 = arith.cmpi eq, %15, %16 : vector<8x32xi32>
    %cst_5 = arith.constant 0.000000e+00 : f32
    %18 = vector.broadcast %cst_5 : f32 to vector<8x32xf32>
    %19 = arith.select %17, %11, %18 : vector<8x32xi1>, vector<8x32xf32>
    %cst_6 = arith.constant dense<0.000000e+00> : vector<8xf32>
    %20 = vector.multi_reduction <add>, %19, %cst_6 [1] : vector<8x32xf32> to vector<8xf32>
    %21 = vector.shape_cast %20 : vector<8xf32> to vector<8x1xf32>
    %22 = math.log %14 : vector<8x1xf32>
    %23 = arith.subf %22, %21 : vector<8x1xf32>
    %24 = arith.subf %21, %22 : vector<8x1xf32>
    %25 = math.exp %24 : vector<8x1xf32>
    %cst_7 = arith.constant 1.000000e+00 : f32
    %26 = vector.broadcast %cst_7 : f32 to vector<8x1xf32>
    %27 = arith.subf %26, %25 : vector<8x1xf32>
    %cst_8 = arith.constant 0.000000e+00 : f32
    %28 = vector.broadcast %cst_8 : f32 to vector<8x1xf32>
    %29 = arith.maximumf %27, %28 : vector<8x1xf32>
    %cst_9 = arith.constant 1.000000e+00 : f32
    %30 = vector.broadcast %cst_9 : f32 to vector<8x1xf32>
    %31 = arith.mulf %30, %29 : vector<8x1xf32>
    %32 = arith.mulf %31, %29 : vector<8x1xf32>
    %cst_10 = arith.constant 2.500000e-01 : f32
    %33 = vector.broadcast %cst_10 : f32 to vector<8x1xf32>
    %34 = arith.mulf %33, %32 : vector<8x1xf32>
    %35 = arith.mulf %34, %23 : vector<8x1xf32>
    %36 = tpu.iota {dimensions = array<i32: 0>} : vector<8x1xi32>
    %37 = vector.broadcast %5 : i32 to vector<8x1xi32>
    %38 = arith.addi %37, %36 : vector<8x1xi32>
    %c8_i32_11 = arith.constant 8 : i32
    %39 = vector.broadcast %c8_i32_11 : i32 to vector<8x1xi32>
    %40 = arith.cmpi slt, %38, %39 : vector<8x1xi32>
    %c0_12 = arith.constant 0 : index
    %c0_13 = arith.constant 0 : index
    %41 = vector.load %arg4[%c0_12, %c0_13] : memref<8x128xf32, #tpu.memory_space<vmem>>, vector<8x128xf32>
    %cst_14 = arith.constant 0.000000e+00 : f32
    %42 = vector.broadcast %cst_14 : f32 to vector<8x1xf32>
    %43 = arith.select %40, %35, %42 : vector<8x1xi1>, vector<8x1xf32>
    %44 = vector.shape_cast %43 : vector<8x1xf32> to vector<1x8x1xf32>
    %cst_15 = arith.constant dense<0.000000e+00> : vector<1xf32>
    %45 = vector.multi_reduction <add>, %44, %cst_15 [1, 2] : vector<1x8x1xf32> to vector<1xf32>
    %46 = vector.shape_cast %45 : vector<1xf32> to vector<1x1x1xf32>
    %47 = vector.extract %46[0, 0, 0] : f32 from vector<1x1x1xf32>
    %48 = vector.broadcast %47 : f32 to vector<8x128xf32>
    %49 = arith.addf %41, %48 : vector<8x128xf32>
    %c0_16 = arith.constant 0 : index
    %c0_17 = arith.constant 0 : index
    %50 = vector.load %arg4[%c0_16, %c0_17] : memref<8x128xf32, #tpu.memory_space<vmem>>, vector<8x128xf32>
    tpu.vector_store %arg4[%c0_16, %c0_17], %49 {strides = array<i32>} : memref<8x128xf32, #tpu.memory_space<vmem>>, vector<8x128xf32>,
    return
  }
  func.func @transform_0(%arg0: i32, %arg1: i32) -> (i32, i32) {
    %c1_i32 = arith.constant 1 : i32
    %0 = arith.muli %arg0, %c1_i32 : i32
    %1 = arith.addi %0, %arg1 : i32
    %c0_i32 = arith.constant 0 : i32
    %2 = arith.minsi %1, %c0_i32 : i32
    %c0_i32_0 = arith.constant 0 : i32
    %c0_i32_1 = arith.constant 0 : i32
    return %2, %c0_i32_0 : i32, i32
  }
  func.func @transform_1(%arg0: i32, %arg1: i32) -> (i32, i32) {
    %c1_i32 = arith.constant 1 : i32
    %0 = arith.muli %arg0, %c1_i32 : i32
    %1 = arith.addi %0, %arg1 : i32
    %c0_i32 = arith.constant 0 : i32
    %2 = arith.minsi %1, %c0_i32 : i32
    %c0_i32_0 = arith.constant 0 : i32
    %c0_i32_1 = arith.constant 0 : i32
    return %2, %c0_i32_0 : i32, i32
  }
  func.func @transform_2(%arg0: i32, %arg1: i32) -> (i32, i32) {
    %c0_i32 = arith.constant 0 : i32
    %c0_i32_0 = arith.constant 0 : i32
    return %arg0, %c0_i32 : i32, i32
  }
}

</mosaic_0001>

<llo_original>
// kernel: tpu_custom_call.1
$region0: #{tpu_custom_call.1}
  #allocation0 [shape = 'u32[]', space=smem, size = 0x4, offset = 0x4, fixed_abs, tag = 'smem constant byte address 0x4 - core index']
  #allocation1 [shape = 'u32[144,128]{1,0:T(1,128)}', space=vmem, size = 0x12000, scoped, tag = 'internal scratch']
  %s0 = inlined_call_operand.vmem [shape: f32[8,32], index: 0, kind: input, shape index: {}]
  %s1 = inlined_call_operand.vmem [shape: s32[8,1], index: 1, kind: input, shape index: {}]
  %s2 = inlined_call_operand.hbm [shape: f32[8,128], index: 2, kind: output, shape index: {}]
  %s3 = sld [smem:[#allocation0]]
  $region22: #{tpu_custom_call.1} parent=0
    _
  %s5 = ssub.s32 1, %s3
  %s6 = scalar_select 0, %s5, %s3
  $region1: #{tpu_custom_call.1} parent=0
    #allocation2 [shape = 'u8[4096]{0}', space=vmem, size = 0x1000, scoped, tag = 'output window, operand 0, single buffered']
    #allocation3 [shape = 's32[1]{0}', space=sflag, size = 0x4, scoped, tag = 'scoped memory for tpu_custom_call.1']
    %7 = vsyncpa [#allocation3], 0
    // Predicated region
    $region2: #{tpu_custom_call.1} parent=1 // pred_check
      _
    $region3: #{tpu_custom_call.1} parent=1 // pred_check_branch
      %9 = sbr.rel (0) target = $region5
    $region4: #{tpu_custom_call.1} parent=1 // pred_region
      %s10 = sadd.s32 0, 0
      %p11 = scmp.lt.s32.totalorder %s10, 0
      %s12 = scalar_select %p11, %s10, 0
      %p13 = scmp.lt.s32.totalorder %s12, 0
      %s14 = scalar_select %p13, %s12, 0
      %s15 = smul.addr %s14, 8
      %s16 = scalar_lea.vmem %s0, %s15
      %s17 = sadd.s32 0, 0
      %p18 = scmp.lt.s32.totalorder %s17, 0
      %s19 = scalar_select %p18, %s17, 0
    $region5: #{tpu_custom_call.1} parent=1 // pred_fallthru
      _
    // Predicated region
    $region6: #{tpu_custom_call.1} parent=1 // pred_check
      _
    $region7: #{tpu_custom_call.1} parent=1 // pred_check_branch
      %21 = sbr.rel (0) target = $region9
    $region8: #{tpu_custom_call.1} parent=1 // pred_region
      %s22 = sadd.s32 0, 0
      %p23 = scmp.lt.s32.totalorder %s22, 0
      %s24 = scalar_select %p23, %s22, 0
      %p25 = scmp.lt.s32.totalorder %s24, 0
      %s26 = scalar_select %p25, %s24, 0
      %s27 = smul.addr %s26, 8
      %s28 = scalar_lea.vmem %s1, %s27
      %s29 = sadd.s32 0, 0
      %p30 = scmp.lt.s32.totalorder %s29, 0
      %s31 = scalar_select %p30, %s29, 0
    $region9: #{tpu_custom_call.1} parent=1 // pred_fallthru
      _
    %s32 = sadd.s32 0, 0
    %p33 = scmp.lt.s32.totalorder %s32, 0
    %s34 = scalar_select %p33, %s32, 0
    %p35 = scmp.lt.s32.totalorder %s34, 0
    %s36 = scalar_select %p35, %s34, 0
    %s37 = smul.addr %s36, 8
    %s38 = scalar_lea.vmem %s0, %s37
    %s39 = sadd.s32 0, 0
    %p40 = scmp.lt.s32.totalorder %s39, 0
    %s41 = scalar_select %p40, %s39, 0
    %p42 = scmp.lt.s32.totalorder %s41, 0
    %s43 = scalar_select %p42, %s41, 0
    %s44 = smul.addr %s43, 8
    %s45 = scalar_lea.vmem %s1, %s44
    %s46 = sadd.s32 0, 0
    %p47 = scmp.lt.s32.totalorder %s46, 0
    %s48 = scalar_select %p47, %s46, 0
    %p49 = scmp.lt.s32.totalorder %s48, 0
    %s50 = scalar_select %p49, %s48, 0
    %s51 = smul.addr %s50, 8
    %s52 = scalar_lea.vmem %s0, %s51
    %s53 = sadd.s32 0, 0
    %p54 = scmp.lt.s32.totalorder %s53, 0
    %s55 = scalar_select %p54, %s53, 0
    %s56 = sadd.s32 0, 0
    %p57 = scmp.lt.s32.totalorder %s56, 0
    %s58 = scalar_select %p57, %s56, 0
    %p59 = scmp.lt.s32.totalorder %s58, 0
    %s60 = scalar_select %p59, %s58, 0
    %s61 = smul.addr %s60, 8
    %s62 = scalar_lea.vmem %s1, %s61
    %s63 = sadd.s32 0, 0
    %p64 = scmp.lt.s32.totalorder %s63, 0
    %s65 = scalar_select %p64, %s63, 0
    %p66 = scmp.eq.s32.totalorder 0, 0
    // Predicated region
    $region10: #{tpu_custom_call.1} parent=1 // pred_check
      %p67 = pneg %p66
    $region11: #{tpu_custom_call.1} parent=1 // pred_check_branch
      %69 = sbr.rel (%p67) target = $region13
    $region12: #{tpu_custom_call.1} parent=1 // pred_region
      %70 = vst [vmem:[#allocation2] sm:$0xff] 0.0
    $region13: #{tpu_custom_call.1} parent=1 // pred_fallthru
      _
    %s71 = sadd.s32 0, 0
    %s72 = smul.u32 %s71, 8
    %v73 = vld [vmem:[%s52] sm:$0xff]
    %v74 = vld [vmem:[%s62] sm:$0xff]
    %vm75 = vcmask 261120
    %v76 = vsel %vm75, %v73, -inf
    %77 = vmax.xlane.f32.xlu0 %v76
    %v78 = vpop.xlane.xlu0 %77
    %v79 = vsub.f32 %v73, %v78
    %v80 = vmul.f32 %v79, 1.442695
    %v81 = vpow.pop %v80
    %v82 = vsel %vm75, %v81, 0.0
    %83 = vadd.xlane.f32.xlu0 %v82
    %v84 = vpop.xlane.xlu0 %83
    %v85 = vlaneseq
    %v86 = vand.u32 %v85, 127
    %87 = vset.pattern.permute.xlu0 0
    %88 = vperm.xlu0 %87, %v74
    %v89 = vpop.permute.xlu0 %88
    %vm90 = vcmp.eq.s32.totalorder %v86, %v89
    %v91 = vsel %vm90, %v79, 0.0
    %v92 = vsel %vm75, %v91, 0.0
    %93 = vadd.xlane.f32.xlu0 %v92
    %v94 = vpop.xlane.xlu0 %93
    %v95 = vlog2.pop %v84
    %v96 = vmul.f32 %v95, 0.6931472
    %v97 = vsub.f32 %v96, %v94
    %v98 = vsub.f32 %v94, %v96
    %v99 = vmul.f32 %v98, 1.442695
    %v100 = vpow.pop %v99
    %v101 = vsub.f32 1.0, %v100
    %v102 = vmax.f32 %v101, 0.0
    %v103 = vmul.f32 %v102, %v102
    %v104 = vmul.f32 %v103, 0.25
    %v105 = vmul.f32 %v104, %v97
    %v106 = vlaneseq
    %v107 = vshrl.u32 %v106, 7
    %v108 = vstv %s72
    %v109 = vadd.s32 %v108, %v107
    %vm110 = vcmp.lt.s32.totalorder %v109, 8
    %v111 = vld [vmem:[#allocation2] sm:$0xff]
    %v112 = vsel %vm110, %v105, 0.0
    %vm113 = vcmask 7168
    %v114 = vsel %vm113, %v112, 0.0
    %115 = vadd.xlane.f32.xlu0 %v114
    %v116 = vpop.xlane.xlu0 %115
    %v117 = vrot.slane %v116, 4
    %v118 = vadd.f32 %v116, %v117
    %v119 = vrot.slane %v118, 2
    %v120 = vadd.f32 %v118, %v119
    %v121 = vrot.slane %v120, 1
    %v122 = vadd.f32 %v120, %v121
    %s123 = vtos %v122
    %v124 = vstv %s123
    %v125 = vadd.f32 %v111, %v124
    %126 = vst [vmem:[#allocation2] sm:$0xff] %v125
    // Predicated region
    $region14: #{tpu_custom_call.1} parent=1 // pred_check
      _
    $region15: #{tpu_custom_call.1} parent=1 // pred_check_branch
      %128 = sbr.rel (0) target = $region17
    $region16: #{tpu_custom_call.1} parent=1 // pred_region
      %s130 = ssub.s32 128, 128
      %131 = vsyncadd [#allocation3], %s130
      %s133 = sshll.u32 [#allocation2], 4
      %s134 = int_to_ptr.vmem [resolvable:$true] %s133
      %136 = dma.vmem_to_hbm [thread:$0]  %s134, 128, %s2, [#allocation3]
    $region17: #{tpu_custom_call.1} parent=1 // pred_fallthru
      _
    // Predicated region
    $region18: #{tpu_custom_call.1} parent=1 // pred_check
      _
    $region19: #{tpu_custom_call.1} parent=1 // pred_check_branch
      %138 = sbr.rel (0) target = $region21
    $region20: #{tpu_custom_call.1} parent=1 // pred_region
      %139 = dma.done [#allocation3], 128
    $region21: #{tpu_custom_call.1} parent=1 // pred_fallthru
      _
    %140 = vsyncpa [#allocation3], 1

</llo_original>
